<compile_context>
chip_gen: v5e
topology: v5e:2x2
jax: 0.10.0
libtpu: 0.0.40
codegen_flags: <defaults>
</compile_context>

<pallas_src>
import jax
import jax.numpy as jnp
from jax.experimental import pallas as pl
from jax.experimental.pallas import tpu as pltpu


def classifier_kernel(x_ref, w1_ref, b1_ref, w2_ref, b2_ref, w3_ref, b3_ref, o_ref):
    # x_ref : (TB, L, 512) bf16      w1_ref: (512, H) bf16 (pre-scaled by 1/L)
    # b1_ref: (1, H) f32             w2_ref: (H, H) bf16    b2_ref: (1, H) f32
    # w3_ref: (1, H) f32             b3_ref: (1, 1) f32     o_ref : (TB, 1) f32

    # AdaptiveAvgPool1d(1): the 1/L is folded into w1, so pooling is an f32 sum over L
    # (a sublane reduce, since C=512 sits on the lane axis).
    pooled = jnp.sum(x_ref[...].astype(jnp.float32), axis=1)          # (TB, 512) f32

    # fc1 + ReLU  (bf16 MXU operands, f32 accumulation)
    h1 = jnp.dot(pooled.astype(jnp.bfloat16), w1_ref[...],
                 preferred_element_type=jnp.float32) + b1_ref[...]
    h1 = jnp.maximum(h1, 0.0)

    # fc2 + ReLU
    h2 = jnp.dot(h1.astype(jnp.bfloat16), w2_ref[...],
                 preferred_element_type=jnp.float32) + b2_ref[...]
    h2 = jnp.maximum(h2, 0.0)

    # fc3 (N=1): VPU multiply + row reduce instead of a 1-lane-wide MXU matmul.
    logits = jnp.sum(h2 * w3_ref[...], axis=-1, keepdims=True) + b3_ref[...]

    o_ref[...] = jax.nn.sigmoid(logits).astype(o_ref.dtype)


def _round_up(n, m):
    return (n + m - 1) // m * m


def binary_classifier_forward(x, w1, b1, w2, b2, w3, b3, *, block_b=128):
    """x: (B, 512, L) f32 (PyTorch NCL).  w1:(512,H) b1:(1,H) w2:(H,H) b2:(1,H) w3:(H,1) b3:(1,1)."""
    B, C, L = x.shape
    H = w1.shape[1]

    # Lane-dense layout: put C=512 on the 128-lane axis.
    x_t = jnp.transpose(x, (0, 2, 1))                       # (B, L, 512)

    # Batch tile (MXU M dim); pad B so the grid divides exactly.
    TB = min(block_b, _round_up(B, 8))
    B_pad = _round_up(B, TB)
    if B_pad != B:
        x_t = jnp.pad(x_t, ((0, B_pad - B), (0, 0), (0, 0)))

    # bf16 MXU operands; fold the average-pool 1/L into w1.  Biases / fc3 stay f32.
    x_bf = x_t.astype(jnp.bfloat16)
    w1_s = (w1 * (1.0 / L)).astype(jnp.bfloat16)            # (512, H)
    w2_b = w2.astype(jnp.bfloat16)                          # (H, H)
    b1_2 = b1.reshape(1, H).astype(jnp.float32)
    b2_2 = b2.reshape(1, H).astype(jnp.float32)
    w3_r = w3.reshape(H, 1).T.astype(jnp.float32)           # (1, H)
    b3_2 = b3.reshape(1, 1).astype(jnp.float32)

    grid = (B_pad // TB,)
    out = pl.pallas_call(
        classifier_kernel,
        out_shape=jax.ShapeDtypeStruct((B_pad, 1), jnp.float32),
        grid=grid,
        in_specs=[
            pl.BlockSpec((TB, L, C), lambda i: (i, 0, 0)),   # x tile, pipelined over batch
            pl.BlockSpec((C, H), lambda i: (0, 0)),          # w1 (resident)
            pl.BlockSpec((1, H), lambda i: (0, 0)),          # b1
            pl.BlockSpec((H, H), lambda i: (0, 0)),          # w2
            pl.BlockSpec((1, H), lambda i: (0, 0)),          # b2
            pl.BlockSpec((1, H), lambda i: (0, 0)),          # w3 (row)
            pl.BlockSpec((1, 1), lambda i: (0, 0)),          # b3
        ],
        out_specs=pl.BlockSpec((TB, 1), lambda i: (i, 0)),
        compiler_params=pltpu.CompilerParams(
            dimension_semantics=("parallel",),               # shard batch tiles across TCs (v7x)
        ),
    )(x_bf, w1_s, b1_2, w2_b, b2_2, w3_r, b3_2)
    return out[:B]


def _reference(x, w1, b1, w2, b2, w3, b3):
    pooled = jnp.mean(x, axis=-1)                            # AdaptiveAvgPool1d(1) + reshape
    h1 = jnp.maximum(pooled @ w1 + b1, 0.0)
    h2 = jnp.maximum(h1 @ w2 + b2, 0.0)
    return jax.nn.sigmoid(h2 @ w3 + b3)


if __name__ == "__main__":
    key = jax.random.PRNGKey(0)
    B, C, L, H = 2, 512, 8, 64   # fc1 requires 512 input features -> C = 512

    k_x, k_w1, k_b1, k_w2, k_b2, k_w3, k_b3 = jax.random.split(key, 7)

    x = jax.random.normal(k_x, (B, C, L), dtype=jnp.float32)

    # Deterministic param init, PyTorch-Linear-style uniform(-1/sqrt(fan_in), 1/sqrt(fan_in)).
    def uinit(k, shape, fan_in):
        bound = 1.0 / jnp.sqrt(float(fan_in))
        return jax.random.uniform(k, shape, jnp.float32, -bound, bound)

    w1 = uinit(k_w1, (512, H), 512)   # fc1 weight (stored transposed: in, out)
    b1 = uinit(k_b1, (1, H), 512)     # fc1 bias
    w2 = uinit(k_w2, (H, H), H)       # fc2 weight (transposed)
    b2 = uinit(k_b2, (1, H), H)       # fc2 bias
    w3 = uinit(k_w3, (H, 1), H)       # fc3 weight (transposed)
    b3 = uinit(k_b3, (1, 1), H)       # fc3 bias

    out = binary_classifier_forward(x, w1, b1, w2, b2, w3, b3)
    out = jax.block_until_ready(out)

    ref = _reference(x, w1, b1, w2, b2, w3, b3)
    assert out.shape == (B, 1)
    # bf16 MXU operands with f32 accumulation -> small rounding vs. the pure-f32 reference.
    assert jnp.allclose(out, ref, atol=1e-2, rtol=1e-2), (out, ref)

    print("KERNEL_OK")
</pallas_src>

<mosaic_0001>
module attributes {stable_mosaic.version = 11 : i64} {
  func.func @classifier_kernel(%arg0: i32, %arg1: memref<8x8x512xbf16, #tpu.memory_space<vmem>>, %arg2: memref<512x64xbf16, #tpu.memory_space<vmem>>, %arg3: memref<1x64xf32, #tpu.memory_space<vmem>>, %arg4: memref<64x64xbf16, #tpu.memory_space<vmem>>, %arg5: memref<1x64xf32, #tpu.memory_space<vmem>>, %arg6: memref<1x64xf32, #tpu.memory_space<vmem>>, %arg7: memref<1x1xf32, #tpu.memory_space<vmem>>, %arg8: memref<8x1xf32, #tpu.memory_space<vmem>>) attributes {dimension_semantics = [#tpu.dimension_semantics<parallel>], iteration_bounds = array<i64: 1>, scalar_prefetch = 0 : i64, scratch_operands = 0 : i64, tpu.core_type = #tpu.core_type<tc>, window_params = [{transform_indices = @transform_0, window_bounds = array<i64: 8, 8, 512>}, {pipeline_mode = #tpu.pipeline_mode<synchronous>, transform_indices = @transform_1, window_bounds = array<i64: 512, 64>}, {pipeline_mode = #tpu.pipeline_mode<synchronous>, transform_indices = @transform_2, window_bounds = array<i64: 1, 64>}, {pipeline_mode = #tpu.pipeline_mode<synchronous>, transform_indices = @transform_3, window_bounds = array<i64: 64, 64>}, {pipeline_mode = #tpu.pipeline_mode<synchronous>, transform_indices = @transform_4, window_bounds = array<i64: 1, 64>}, {pipeline_mode = #tpu.pipeline_mode<synchronous>, transform_indices = @transform_5, window_bounds = array<i64: 1, 64>}, {pipeline_mode = #tpu.pipeline_mode<synchronous>, transform_indices = @transform_6, window_bounds = array<i64: 1, 1>}, {transform_indices = @transform_7, window_bounds = array<i64: 8, 1>}]} {
    %c0 = arith.constant 0 : index
    %c0_0 = arith.constant 0 : index
    %c0_1 = arith.constant 0 : index
    %0 = vector.load %arg1[%c0, %c0_0, %c0_1] : memref<8x8x512xbf16, #tpu.memory_space<vmem>>, vector<8x8x512xbf16>
    %1 = arith.extf %0 : vector<8x8x512xbf16> to vector<8x8x512xf32>
    %cst = arith.constant dense<0.000000e+00> : vector<8x512xf32>
    %2 = vector.multi_reduction <add>, %1, %cst [1] : vector<8x8x512xf32> to vector<8x512xf32>
    %3 = arith.truncf %2 : vector<8x512xf32> to vector<8x512xbf16>
    %c0_2 = arith.constant 0 : index
    %c0_3 = arith.constant 0 : index
    %4 = vector.load %arg2[%c0_2, %c0_3] : memref<512x64xbf16, #tpu.memory_space<vmem>>, vector<512x64xbf16>
    %cst_4 = arith.constant dense<0.000000e+00> : vector<8x64xf32>
    %5 = tpu.matmul %3, %4, %cst_4 {dimension_numbers = #tpu.dot_dimension_numbers<[1], [0], [0], [1], [0, 0, 1, 1], [], []>} : vector<8x512xbf16>, vector<512x64xbf16>, vector<8x64xf32> -> vector<8x64xf32>
    %c0_5 = arith.constant 0 : index
    %c0_6 = arith.constant 0 : index
    %6 = vector.load %arg3[%c0_5, %c0_6] : memref<1x64xf32, #tpu.memory_space<vmem>>, vector<1x64xf32>
    %7 = vector.broadcast %6 : vector<1x64xf32> to vector<8x64xf32>
    %8 = arith.addf %5, %7 : vector<8x64xf32>
    %cst_7 = arith.constant 0.000000e+00 : f32
    %9 = vector.broadcast %cst_7 : f32 to vector<8x64xf32>
    %10 = arith.maximumf %8, %9 : vector<8x64xf32>
    %11 = arith.truncf %10 : vector<8x64xf32> to vector<8x64xbf16>
    %c0_8 = arith.constant 0 : index
    %c0_9 = arith.constant 0 : index
    %12 = vector.load %arg4[%c0_8, %c0_9] : memref<64x64xbf16, #tpu.memory_space<vmem>>, vector<64x64xbf16>
    %cst_10 = arith.constant dense<0.000000e+00> : vector<8x64xf32>
    %13 = tpu.matmul %11, %12, %cst_10 {dimension_numbers = #tpu.dot_dimension_numbers<[1], [0], [0], [1], [0, 0, 1, 1], [], []>} : vector<8x64xbf16>, vector<64x64xbf16>, vector<8x64xf32> -> vector<8x64xf32>
    %c0_11 = arith.constant 0 : index
    %c0_12 = arith.constant 0 : index
    %14 = vector.load %arg5[%c0_11, %c0_12] : memref<1x64xf32, #tpu.memory_space<vmem>>, vector<1x64xf32>
    %15 = vector.broadcast %14 : vector<1x64xf32> to vector<8x64xf32>
    %16 = arith.addf %13, %15 : vector<8x64xf32>
    %cst_13 = arith.constant 0.000000e+00 : f32
    %17 = vector.broadcast %cst_13 : f32 to vector<8x64xf32>
    %18 = arith.maximumf %16, %17 : vector<8x64xf32>
    %c0_14 = arith.constant 0 : index
    %c0_15 = arith.constant 0 : index
    %19 = vector.load %arg6[%c0_14, %c0_15] : memref<1x64xf32, #tpu.memory_space<vmem>>, vector<1x64xf32>
    %20 = vector.broadcast %19 : vector<1x64xf32> to vector<8x64xf32>
    %21 = arith.mulf %18, %20 : vector<8x64xf32>
    %cst_16 = arith.constant dense<0.000000e+00> : vector<8xf32>
    %22 = vector.multi_reduction <add>, %21, %cst_16 [1] : vector<8x64xf32> to vector<8xf32>
    %23 = vector.shape_cast %22 : vector<8xf32> to vector<8x1xf32>
    %c0_17 = arith.constant 0 : index
    %c0_18 = arith.constant 0 : index
    %24 = vector.load %arg7[%c0_17, %c0_18] : memref<1x1xf32, #tpu.memory_space<vmem>>, vector<1x1xf32>
    %25 = vector.broadcast %24 : vector<1x1xf32> to vector<8x1xf32>
    %26 = arith.addf %23, %25 : vector<8x1xf32>
    %27 = arith.negf %26 : vector<8x1xf32>
    %28 = math.exp %27 : vector<8x1xf32>
    %cst_19 = arith.constant 1.000000e+00 : f32
    %29 = vector.broadcast %cst_19 : f32 to vector<8x1xf32>
    %30 = arith.addf %29, %28 : vector<8x1xf32>
    %31 = arith.divf %29, %30 : vector<8x1xf32>
    %c0_20 = arith.constant 0 : index
    %c0_21 = arith.constant 0 : index
    %32 = vector.load %arg8[%c0_20, %c0_21] : memref<8x1xf32, #tpu.memory_space<vmem>>, vector<8x1xf32>
    tpu.vector_store %arg8[%c0_20, %c0_21], %31 {strides = array<i32>} : memref<8x1xf32, #tpu.memory_space<vmem>>, vector<8x1xf32>,
    return
  }
  func.func @transform_0(%arg0: i32) -> (i32, i32, i32) {
    %c0_i32 = arith.constant 0 : i32
    %c0_i32_0 = arith.constant 0 : i32
    %c0_i32_1 = arith.constant 0 : i32
    return %arg0, %c0_i32, %c0_i32_0 : i32, i32, i32
  }
  func.func @transform_1(%arg0: i32) -> (i32, i32) {
    %c0_i32 = arith.constant 0 : i32
    %c0_i32_0 = arith.constant 0 : i32
    %c0_i32_1 = arith.constant 0 : i32
    return %c0_i32, %c0_i32_0 : i32, i32
  }
  func.func @transform_2(%arg0: i32) -> (i32, i32) {
    %c0_i32 = arith.constant 0 : i32
    %c0_i32_0 = arith.constant 0 : i32
    %c0_i32_1 = arith.constant 0 : i32
    return %c0_i32, %c0_i32_0 : i32, i32
  }
  func.func @transform_3(%arg0: i32) -> (i32, i32) {
    %c0_i32 = arith.constant 0 : i32
    %c0_i32_0 = arith.constant 0 : i32
    %c0_i32_1 = arith.constant 0 : i32
    return %c0_i32, %c0_i32_0 : i32, i32
  }
  func.func @transform_4(%arg0: i32) -> (i32, i32) {
    %c0_i32 = arith.constant 0 : i32
    %c0_i32_0 = arith.constant 0 : i32
    %c0_i32_1 = arith.constant 0 : i32
    return %c0_i32, %c0_i32_0 : i32, i32
  }
  func.func @transform_5(%arg0: i32) -> (i32, i32) {
    %c0_i32 = arith.constant 0 : i32
    %c0_i32_0 = arith.constant 0 : i32
    %c0_i32_1 = arith.constant 0 : i32
    return %c0_i32, %c0_i32_0 : i32, i32
  }
  func.func @transform_6(%arg0: i32) -> (i32, i32) {
    %c0_i32 = arith.constant 0 : i32
    %c0_i32_0 = arith.constant 0 : i32
    %c0_i32_1 = arith.constant 0 : i32
    return %c0_i32, %c0_i32_0 : i32, i32
  }
  func.func @transform_7(%arg0: i32) -> (i32, i32) {
    %c0_i32 = arith.constant 0 : i32
    %c0_i32_0 = arith.constant 0 : i32
    return %arg0, %c0_i32 : i32, i32
  }
}

</mosaic_0001>

<llo_original>
// kernel: tpu_custom_call.1
$region0: #{tpu_custom_call.1}
  #allocation0 [shape = 'u32[]', space=smem, size = 0x4, offset = 0x4, fixed_abs, tag = 'smem constant byte address 0x4 - core index']
  #allocation1 [shape = 'u32[72,128]{1,0:T(1,128)}', space=vmem, size = 0x9000, scoped, tag = 'internal scratch']
  #allocation2 [shape = 'f32[1,1]{1,0:T(1,128)S(1)}', space=vmem, size = 0x200, scoped, tag = 'scoped memory for tpu_custom_call.1']
  %s0 = inlined_call_operand.vmem [shape: bf16[8,8,512], index: 0, kind: input, shape index: {}]
  %s1 = inlined_call_operand.vmem [shape: bf16[512,64], index: 1, kind: input, shape index: {}]
  %s2 = inlined_call_operand.vmem [shape: f32[1,64], index: 2, kind: input, shape index: {}]
  %s3 = inlined_call_operand.vmem [shape: bf16[64,64], index: 3, kind: input, shape index: {}]
  %s4 = inlined_call_operand.vmem [shape: f32[1,64], index: 4, kind: input, shape index: {}]
  %s5 = inlined_call_operand.vmem [shape: f32[1,64], index: 5, kind: input, shape index: {}]
  %s6 = inlined_call_operand.<no memory space> [shape: f32[1,1], index: 6, kind: input, shape index: {}]
  %s7 = inlined_call_operand.vmem [shape: f32[8,1], index: 7, kind: output, shape index: {}]
  %s8 = sld [smem:[#allocation0]]
  $region38: #{tpu_custom_call.1} parent=0
    _
  %s10 = ssub.s32 1, %s8
  %s11 = scalar_select 0, %s10, %s8
  %v12 = vstv %s6
  %13 = vst [vmem:[#allocation2] sm:$0x1] %v12
  // Predicated region
  $region2: #{tpu_custom_call.1} parent=0 // pred_check
    _
  $region3: #{tpu_custom_call.1} parent=0 // pred_check_branch
    %15 = sbr.rel (0) target = $region5
  $region4: #{tpu_custom_call.1} parent=0 // pred_region
    _
  $region5: #{tpu_custom_call.1} parent=0 // pred_fallthru
    _
  // Predicated region
  $region6: #{tpu_custom_call.1} parent=0 // pred_check
    _
  $region7: #{tpu_custom_call.1} parent=0 // pred_check_branch
    %17 = sbr.rel (0) target = $region9
  $region8: #{tpu_custom_call.1} parent=0 // pred_region
    _
  $region9: #{tpu_custom_call.1} parent=0 // pred_fallthru
    _
  // Predicated region
  $region10: #{tpu_custom_call.1} parent=0 // pred_check
    _
  $region11: #{tpu_custom_call.1} parent=0 // pred_check_branch
    %19 = sbr.rel (0) target = $region13
  $region12: #{tpu_custom_call.1} parent=0 // pred_region
    _
  $region13: #{tpu_custom_call.1} parent=0 // pred_fallthru
    _
  // Predicated region
  $region14: #{tpu_custom_call.1} parent=0 // pred_check
    _
  $region15: #{tpu_custom_call.1} parent=0 // pred_check_branch
    %21 = sbr.rel (0) target = $region17
  $region16: #{tpu_custom_call.1} parent=0 // pred_region
    _
  $region17: #{tpu_custom_call.1} parent=0 // pred_fallthru
    _
  // Predicated region
  $region18: #{tpu_custom_call.1} parent=0 // pred_check
    _
  $region19: #{tpu_custom_call.1} parent=0 // pred_check_branch
    %23 = sbr.rel (0) target = $region21
  $region20: #{tpu_custom_call.1} parent=0 // pred_region
    _
  $region21: #{tpu_custom_call.1} parent=0 // pred_fallthru
    _
  // Predicated region
  $region22: #{tpu_custom_call.1} parent=0 // pred_check
    _
  $region23: #{tpu_custom_call.1} parent=0 // pred_check_branch
    %25 = sbr.rel (0) target = $region25
  $region24: #{tpu_custom_call.1} parent=0 // pred_region
    _
  $region25: #{tpu_custom_call.1} parent=0 // pred_fallthru
    _
  // Predicated region
  $region26: #{tpu_custom_call.1} parent=0 // pred_check
    _
  $region27: #{tpu_custom_call.1} parent=0 // pred_check_branch
    %27 = sbr.rel (0) target = $region29
  $region28: #{tpu_custom_call.1} parent=0 // pred_region
    _
  $region29: #{tpu_custom_call.1} parent=0 // pred_fallthru
    _
  %v29 = vld [vmem:[%s0] sm:$0xff]
  %v30 = vld [vmem:[%s0 + $0x8] sm:$0xff]
  %v31 = vld [vmem:[%s0 + $0x10] sm:$0xff]
  %v32 = vld [vmem:[%s0 + $0x18] sm:$0xff]
  %v33 = vld [vmem:[%s0 + $0x20] sm:$0xff]
  %v34 = vld [vmem:[%s0 + $0x28] sm:$0xff]
  %v35 = vld [vmem:[%s0 + $0x30] sm:$0xff]
  %v36 = vld [vmem:[%s0 + $0x38] sm:$0xff]
  %v37 = vld [vmem:[%s0 + $0x40] sm:$0xff]
  %v38 = vld [vmem:[%s0 + $0x48] sm:$0xff]
  %v39 = vld [vmem:[%s0 + $0x50] sm:$0xff]
  %v40 = vld [vmem:[%s0 + $0x58] sm:$0xff]
  %v41 = vld [vmem:[%s0 + $0x60] sm:$0xff]
  %v42 = vld [vmem:[%s0 + $0x68] sm:$0xff]
  %v43 = vld [vmem:[%s0 + $0x70] sm:$0xff]
  %v44 = vld [vmem:[%s0 + $0x78] sm:$0xff]
  %v45 = vunpack.c.l.bf16 %v29
  %v46 = vunpack.c.h.bf16 %v29
  %v47 = vunpack.c.l.bf16 %v30
  %v48 = vunpack.c.h.bf16 %v30
  %v49 = vunpack.c.l.bf16 %v31
  %v50 = vunpack.c.h.bf16 %v31
  %v51 = vunpack.c.l.bf16 %v32
  %v52 = vunpack.c.h.bf16 %v32
  %v53 = vunpack.c.l.bf16 %v33
  %v54 = vunpack.c.h.bf16 %v33
  %v55 = vunpack.c.l.bf16 %v34
  %v56 = vunpack.c.h.bf16 %v34
  %v57 = vunpack.c.l.bf16 %v35
  %v58 = vunpack.c.h.bf16 %v35
  %v59 = vunpack.c.l.bf16 %v36
  %v60 = vunpack.c.h.bf16 %v36
  %v61 = vunpack.c.l.bf16 %v37
  %v62 = vunpack.c.h.bf16 %v37
  %v63 = vunpack.c.l.bf16 %v38
  %v64 = vunpack.c.h.bf16 %v38
  %v65 = vunpack.c.l.bf16 %v39
  %v66 = vunpack.c.h.bf16 %v39
  %v67 = vunpack.c.l.bf16 %v40
  %v68 = vunpack.c.h.bf16 %v40
  %v69 = vunpack.c.l.bf16 %v41
  %v70 = vunpack.c.h.bf16 %v41
  %v71 = vunpack.c.l.bf16 %v42
  %v72 = vunpack.c.h.bf16 %v42
  %v73 = vunpack.c.l.bf16 %v43
  %v74 = vunpack.c.h.bf16 %v43
  %v75 = vunpack.c.l.bf16 %v44
  %v76 = vunpack.c.h.bf16 %v44
  %v77 = vrot.slane %v45, 4
  %v78 = vadd.f32 %v45, %v77
  %v79 = vrot.slane %v78, 2
  %v80 = vadd.f32 %v78, %v79
  %v81 = vrot.slane %v80, 1
  %v82 = vadd.f32 %v80, %v81
  %v83 = vrot.slane %v46, 4
  %v84 = vadd.f32 %v46, %v83
  %v85 = vrot.slane %v84, 2
  %v86 = vadd.f32 %v84, %v85
  %v87 = vrot.slane %v86, 1
  %v88 = vadd.f32 %v86, %v87
  %v89 = vrot.slane %v47, 4
  %v90 = vadd.f32 %v47, %v89
  %v91 = vrot.slane %v90, 2
  %v92 = vadd.f32 %v90, %v91
  %v93 = vrot.slane %v92, 1
  %v94 = vadd.f32 %v92, %v93
  %v95 = vrot.slane %v48, 4
  %v96 = vadd.f32 %v48, %v95
  %v97 = vrot.slane %v96, 2
  %v98 = vadd.f32 %v96, %v97
  %v99 = vrot.slane %v98, 1
  %v100 = vadd.f32 %v98, %v99
  %v101 = vrot.slane %v49, 4
  %v102 = vadd.f32 %v49, %v101
  %v103 = vrot.slane %v102, 2
  %v104 = vadd.f32 %v102, %v103
  %v105 = vrot.slane %v104, 1
  %v106 = vadd.f32 %v104, %v105
  %v107 = vrot.slane %v50, 4
  %v108 = vadd.f32 %v50, %v107
  %v109 = vrot.slane %v108, 2
  %v110 = vadd.f32 %v108, %v109
  %v111 = vrot.slane %v110, 1
  %v112 = vadd.f32 %v110, %v111
  %v113 = vrot.slane %v51, 4
  %v114 = vadd.f32 %v51, %v113
  %v115 = vrot.slane %v114, 2
  %v116 = vadd.f32 %v114, %v115
  %v117 = vrot.slane %v116, 1
  %v118 = vadd.f32 %v116, %v117
  %v119 = vrot.slane %v52, 4
  %v120 = vadd.f32 %v52, %v119
  %v121 = vrot.slane %v120, 2
  %v122 = vadd.f32 %v120, %v121
  %v123 = vrot.slane %v122, 1
  %v124 = vadd.f32 %v122, %v123
  %v125 = vrot.slane %v53, 4
  %v126 = vadd.f32 %v53, %v125
  %v127 = vrot.slane %v126, 2
  %v128 = vadd.f32 %v126, %v127
  %v129 = vrot.slane %v128, 1
  %v130 = vadd.f32 %v128, %v129
  %v131 = vrot.slane %v54, 4
  %v132 = vadd.f32 %v54, %v131
  %v133 = vrot.slane %v132, 2
  %v134 = vadd.f32 %v132, %v133
  %v135 = vrot.slane %v134, 1
  %v136 = vadd.f32 %v134, %v135
  %v137 = vrot.slane %v55, 4
  %v138 = vadd.f32 %v55, %v137
  %v139 = vrot.slane %v138, 2
  %v140 = vadd.f32 %v138, %v139
  %v141 = vrot.slane %v140, 1
  %v142 = vadd.f32 %v140, %v141
  %v143 = vrot.slane %v56, 4
  %v144 = vadd.f32 %v56, %v143
  %v145 = vrot.slane %v144, 2
  %v146 = vadd.f32 %v144, %v145
  %v147 = vrot.slane %v146, 1
  %v148 = vadd.f32 %v146, %v147
  %v149 = vrot.slane %v57, 4
  %v150 = vadd.f32 %v57, %v149
  %v151 = vrot.slane %v150, 2
  %v152 = vadd.f32 %v150, %v151
  %v153 = vrot.slane %v152, 1
  %v154 = vadd.f32 %v152, %v153
  %v155 = vrot.slane %v58, 4
  %v156 = vadd.f32 %v58, %v155
  %v157 = vrot.slane %v156, 2
  %v158 = vadd.f32 %v156, %v157
  %v159 = vrot.slane %v158, 1
  %v160 = vadd.f32 %v158, %v159
  %v161 = vrot.slane %v59, 4
  %v162 = vadd.f32 %v59, %v161
  %v163 = vrot.slane %v162, 2
  %v164 = vadd.f32 %v162, %v163
  %v165 = vrot.slane %v164, 1
  %v166 = vadd.f32 %v164, %v165
  %v167 = vrot.slane %v60, 4
  %v168 = vadd.f32 %v60, %v167
  %v169 = vrot.slane %v168, 2
  %v170 = vadd.f32 %v168, %v169
  %v171 = vrot.slane %v170, 1
  %v172 = vadd.f32 %v170, %v171
  %v173 = vrot.slane %v61, 4
  %v174 = vadd.f32 %v61, %v173
  %v175 = vrot.slane %v174, 2
  %v176 = vadd.f32 %v174, %v175
  %v177 = vrot.slane %v176, 1
  %v178 = vadd.f32 %v176, %v177
  %v179 = vrot.slane %v62, 4
  %v180 = vadd.f32 %v62, %v179
  %v181 = vrot.slane %v180, 2
  %v182 = vadd.f32 %v180, %v181
  %v183 = vrot.slane %v182, 1
  %v184 = vadd.f32 %v182, %v183
  %v185 = vrot.slane %v63, 4
  %v186 = vadd.f32 %v63, %v185
  %v187 = vrot.slane %v186, 2
  %v188 = vadd.f32 %v186, %v187
  %v189 = vrot.slane %v188, 1
  %v190 = vadd.f32 %v188, %v189
  %v191 = vrot.slane %v64, 4
  %v192 = vadd.f32 %v64, %v191
  %v193 = vrot.slane %v192, 2
  %v194 = vadd.f32 %v192, %v193
  %v195 = vrot.slane %v194, 1
  %v196 = vadd.f32 %v194, %v195
  %v197 = vrot.slane %v65, 4
  %v198 = vadd.f32 %v65, %v197
  %v199 = vrot.slane %v198, 2
  %v200 = vadd.f32 %v198, %v199
  %v201 = vrot.slane %v200, 1
  %v202 = vadd.f32 %v200, %v201
  %v203 = vrot.slane %v66, 4
  %v204 = vadd.f32 %v66, %v203
  %v205 = vrot.slane %v204, 2
  %v206 = vadd.f32 %v204, %v205
  %v207 = vrot.slane %v206, 1
  %v208 = vadd.f32 %v206, %v207
  %v209 = vrot.slane %v67, 4
  %v210 = vadd.f32 %v67, %v209
  %v211 = vrot.slane %v210, 2
  %v212 = vadd.f32 %v210, %v211
  %v213 = vrot.slane %v212, 1
  %v214 = vadd.f32 %v212, %v213
  %v215 = vrot.slane %v68, 4
  %v216 = vadd.f32 %v68, %v215
  %v217 = vrot.slane %v216, 2
  %v218 = vadd.f32 %v216, %v217
  %v219 = vrot.slane %v218, 1
  %v220 = vadd.f32 %v218, %v219
  %v221 = vrot.slane %v69, 4
  %v222 = vadd.f32 %v69, %v221
  %v223 = vrot.slane %v222, 2
  %v224 = vadd.f32 %v222, %v223
  %v225 = vrot.slane %v224, 1
  %v226 = vadd.f32 %v224, %v225
  %v227 = vrot.slane %v70, 4
  %v228 = vadd.f32 %v70, %v227
  %v229 = vrot.slane %v228, 2
  %v230 = vadd.f32 %v228, %v229
  %v231 = vrot.slane %v230, 1
  %v232 = vadd.f32 %v230, %v231
  %v233 = vrot.slane %v71, 4
  %v234 = vadd.f32 %v71, %v233
  %v235 = vrot.slane %v234, 2
  %v236 = vadd.f32 %v234, %v235
  %v237 = vrot.slane %v236, 1
  %v238 = vadd.f32 %v236, %v237
  %v239 = vrot.slane %v72, 4
  %v240 = vadd.f32 %v72, %v239
  %v241 = vrot.slane %v240, 2
  %v242 = vadd.f32 %v240, %v241
  %v243 = vrot.slane %v242, 1
  %v244 = vadd.f32 %v242, %v243
  %v245 = vrot.slane %v73, 4
  %v246 = vadd.f32 %v73, %v245
  %v247 = vrot.slane %v246, 2
  %v248 = vadd.f32 %v246, %v247
  %v249 = vrot.slane %v248, 1
  %v250 = vadd.f32 %v248, %v249
  %v251 = vrot.slane %v74, 4
  %v252 = vadd.f32 %v74, %v251
  %v253 = vrot.slane %v252, 2
  %v254 = vadd.f32 %v252, %v253
  %v255 = vrot.slane %v254, 1
  %v256 = vadd.f32 %v254, %v255
  %v257 = vrot.slane %v75, 4
  %v258 = vadd.f32 %v75, %v257
  %v259 = vrot.slane %v258, 2
  %v260 = vadd.f32 %v258, %v259
  %v261 = vrot.slane %v260, 1
  %v262 = vadd.f32 %v260, %v261
  %v263 = vrot.slane %v76, 4
  %v264 = vadd.f32 %v76, %v263
  %v265 = vrot.slane %v264, 2
  %v266 = vadd.f32 %v264, %v265
  %v267 = vrot.slane %v266, 1
  %v268 = vadd.f32 %v266, %v267
  %v269 = vpack.c.bf16 %v82, %v82
  %v270 = vpack.c.bf16 %v88, %v88
  %v271 = vpack.c.bf16 %v94, %v94
  %v272 = vpack.c.bf16 %v100, %v100
  %v273 = vpack.c.bf16 %v106, %v106
  %v274 = vpack.c.bf16 %v112, %v112
  %v275 = vpack.c.bf16 %v118, %v118
  %v276 = vpack.c.bf16 %v124, %v124
  %v277 = vpack.c.bf16 %v130, %v130
  %v278 = vpack.c.bf16 %v136, %v136
  %v279 = vpack.c.bf16 %v142, %v142
  %v280 = vpack.c.bf16 %v148, %v148
  %v281 = vpack.c.bf16 %v154, %v154
  %v282 = vpack.c.bf16 %v160, %v160
  %v283 = vpack.c.bf16 %v166, %v166
  %v284 = vpack.c.bf16 %v172, %v172
  %v285 = vpack.c.bf16 %v178, %v178
  %v286 = vpack.c.bf16 %v184, %v184
  %v287 = vpack.c.bf16 %v190, %v190
  %v288 = vpack.c.bf16 %v196, %v196
  %v289 = vpack.c.bf16 %v202, %v202
  %v290 = vpack.c.bf16 %v208, %v208
  %v291 = vpack.c.bf16 %v214, %v214
  %v292 = vpack.c.bf16 %v220, %v220
  %v293 = vpack.c.bf16 %v226, %v226
  %v294 = vpack.c.bf16 %v232, %v232
  %v295 = vpack.c.bf16 %v238, %v238
  %v296 = vpack.c.bf16 %v244, %v244
  %v297 = vpack.c.bf16 %v250, %v250
  %v298 = vpack.c.bf16 %v256, %v256
  %v299 = vpack.c.bf16 %v262, %v262
  %v300 = vpack.c.bf16 %v268, %v268
  %v301 = vld [vmem:[%s1] sm:$0xf]
  %v302 = vld [vmem:[%s1 + $0x4] sm:$0xf]
  %v303 = vld [vmem:[%s1 + $0x8] sm:$0xf]
  %v304 = vld [vmem:[%s1 + $0xc] sm:$0xf]
  %v305 = vld [vmem:[%s1 + $0x10] sm:$0xf]
  %v306 = vld [vmem:[%s1 + $0x14] sm:$0xf]
  %v307 = vld [vmem:[%s1 + $0x18] sm:$0xf]
  %v308 = vld [vmem:[%s1 + $0x1c] sm:$0xf]
  %v309 = vld [vmem:[%s1 + $0x20] sm:$0xf]
  %v310 = vld [vmem:[%s1 + $0x24] sm:$0xf]
  %v311 = vld [vmem:[%s1 + $0x28] sm:$0xf]
  %v312 = vld [vmem:[%s1 + $0x2c] sm:$0xf]
  %v313 = vld [vmem:[%s1 + $0x30] sm:$0xf]
  %v314 = vld [vmem:[%s1 + $0x34] sm:$0xf]
  %v315 = vld [vmem:[%s1 + $0x38] sm:$0xf]
  %v316 = vld [vmem:[%s1 + $0x3c] sm:$0xf]
  %v317 = vld [vmem:[%s1 + $0x40] sm:$0xf]
  %v318 = vld [vmem:[%s1 + $0x44] sm:$0xf]
  %v319 = vld [vmem:[%s1 + $0x48] sm:$0xf]
  %v320 = vld [vmem:[%s1 + $0x4c] sm:$0xf]
  %v321 = vld [vmem:[%s1 + $0x50] sm:$0xf]
  %v322 = vld [vmem:[%s1 + $0x54] sm:$0xf]
  %v323 = vld [vmem:[%s1 + $0x58] sm:$0xf]
  %v324 = vld [vmem:[%s1 + $0x5c] sm:$0xf]
  %v325 = vld [vmem:[%s1 + $0x60] sm:$0xf]
  %v326 = vld [vmem:[%s1 + $0x64] sm:$0xf]
  %v327 = vld [vmem:[%s1 + $0x68] sm:$0xf]
  %v328 = vld [vmem:[%s1 + $0x6c] sm:$0xf]
  %v329 = vld [vmem:[%s1 + $0x70] sm:$0xf]
  %v330 = vld [vmem:[%s1 + $0x74] sm:$0xf]
  %v331 = vld [vmem:[%s1 + $0x78] sm:$0xf]
  %v332 = vld [vmem:[%s1 + $0x7c] sm:$0xf]
  %v333 = vld [vmem:[%s1 + $0x80] sm:$0xf]
  %v334 = vld [vmem:[%s1 + $0x84] sm:$0xf]
  %v335 = vld [vmem:[%s1 + $0x88] sm:$0xf]
  %v336 = vld [vmem:[%s1 + $0x8c] sm:$0xf]
  %v337 = vld [vmem:[%s1 + $0x90] sm:$0xf]
  %v338 = vld [vmem:[%s1 + $0x94] sm:$0xf]
  %v339 = vld [vmem:[%s1 + $0x98] sm:$0xf]
  %v340 = vld [vmem:[%s1 + $0x9c] sm:$0xf]
  %v341 = vld [vmem:[%s1 + $0xa0] sm:$0xf]
  %v342 = vld [vmem:[%s1 + $0xa4] sm:$0xf]
  %v343 = vld [vmem:[%s1 + $0xa8] sm:$0xf]
  %v344 = vld [vmem:[%s1 + $0xac] sm:$0xf]
  %v345 = vld [vmem:[%s1 + $0xb0] sm:$0xf]
  %v346 = vld [vmem:[%s1 + $0xb4] sm:$0xf]
  %v347 = vld [vmem:[%s1 + $0xb8] sm:$0xf]
  %v348 = vld [vmem:[%s1 + $0xbc] sm:$0xf]
  %v349 = vld [vmem:[%s1 + $0xc0] sm:$0xf]
  %v350 = vld [vmem:[%s1 + $0xc4] sm:$0xf]
  %v351 = vld [vmem:[%s1 + $0xc8] sm:$0xf]
  %v352 = vld [vmem:[%s1 + $0xcc] sm:$0xf]
  %v353 = vld [vmem:[%s1 + $0xd0] sm:$0xf]
  %v354 = vld [vmem:[%s1 + $0xd4] sm:$0xf]
  %v355 = vld [vmem:[%s1 + $0xd8] sm:$0xf]
  %v356 = vld [vmem:[%s1 + $0xdc] sm:$0xf]
  %v357 = vld [vmem:[%s1 + $0xe0] sm:$0xf]
  %v358 = vld [vmem:[%s1 + $0xe4] sm:$0xf]
  %v359 = vld [vmem:[%s1 + $0xe8] sm:$0xf]
  %v360 = vld [vmem:[%s1 + $0xec] sm:$0xf]
  %v361 = vld [vmem:[%s1 + $0xf0] sm:$0xf]
  %v362 = vld [vmem:[%s1 + $0xf4] sm:$0xf]
  %v363 = vld [vmem:[%s1 + $0xf8] sm:$0xf]
  %v364 = vld [vmem:[%s1 + $0xfc] sm:$0xf]
  %v365 = vld [vmem:[%s2] sm:$0x1]
  %v367 = vperm.slane %v365, 0
  %v401 = vunpack.c.l.b16 %v269
  %v402 = vunpack.c.l.b16 %v270
  %v403 = vunpack.c.l.b16 %v271
  %v404 = vunpack.c.l.b16 %v272
  %v405 = vunpack.c.l.b16 %v273
  %v406 = vunpack.c.l.b16 %v274
  %v407 = vunpack.c.l.b16 %v275
  %v408 = vunpack.c.l.b16 %v276
  %v409 = vunpack.c.l.b16 %v277
  %v410 = vunpack.c.l.b16 %v278
  %v411 = vunpack.c.l.b16 %v279
  %v412 = vunpack.c.l.b16 %v280
  %v413 = vunpack.c.l.b16 %v281
  %v414 = vunpack.c.l.b16 %v282
  %v415 = vunpack.c.l.b16 %v283
  %v416 = vunpack.c.l.b16 %v284
  %v417 = vunpack.c.l.b16 %v285
  %v418 = vunpack.c.l.b16 %v286
  %v419 = vunpack.c.l.b16 %v287
  %v420 = vunpack.c.l.b16 %v288
  %v421 = vunpack.c.l.b16 %v289
  %v422 = vunpack.c.l.b16 %v290
  %v423 = vunpack.c.l.b16 %v291
  %v424 = vunpack.c.l.b16 %v292
  %v425 = vunpack.c.l.b16 %v293
  %v426 = vunpack.c.l.b16 %v294
  %v427 = vunpack.c.l.b16 %v295
  %v428 = vunpack.c.l.b16 %v296
  %v429 = vunpack.c.l.b16 %v297
  %v430 = vunpack.c.l.b16 %v298
  %v431 = vunpack.c.l.b16 %v299
  %v432 = vunpack.c.l.b16 %v300
  %vm433 = vcmask 1041409
  %v434 = vsel %vm433, %v405, %v401
  %vm435 = vcmask 1042434
  %v436 = vsel %vm435, %v409, %v434
  %vm437 = vcmask 1043459
  %v438 = vsel %vm437, %v413, %v436
  %vm439 = vcmask 1044484
  %v440 = vsel %vm439, %v417, %v438
  %vm441 = vcmask 1045509
  %v442 = vsel %vm441, %v421, %v440
  %vm443 = vcmask 1046534
  %v444 = vsel %vm443, %v425, %v442
  %vm445 = vcmask 1047559
  %v446 = vsel %vm445, %v429, %v444
  %v447 = vsel %vm433, %v406, %v402
  %v448 = vsel %vm435, %v410, %v447
  %v449 = vsel %vm437, %v414, %v448
  %v450 = vsel %vm439, %v418, %v449
  %v451 = vsel %vm441, %v422, %v450
  %v452 = vsel %vm443, %v426, %v451
  %v453 = vsel %vm445, %v430, %v452
  %v454 = vsel %vm433, %v407, %v403
  %v455 = vsel %vm435, %v411, %v454
  %v456 = vsel %vm437, %v415, %v455
  %v457 = vsel %vm439, %v419, %v456
  %v458 = vsel %vm441, %v423, %v457
  %v459 = vsel %vm443, %v427, %v458
  %v460 = vsel %vm445, %v431, %v459
  %v461 = vsel %vm433, %v408, %v404
  %v462 = vsel %vm435, %v412, %v461
  %v463 = vsel %vm437, %v416, %v462
  %v464 = vsel %vm439, %v420, %v463
  %v465 = vsel %vm441, %v424, %v464
  %v466 = vsel %vm443, %v428, %v465
  %v467 = vsel %vm445, %v432, %v466
  %v468 = vpack.c.b16 %v446, %v446
  %v469 = vpack.c.b16 %v453, %v453
  %v470 = vpack.c.b16 %v460, %v460
  %v471 = vpack.c.b16 %v467, %v467
  %v540 = vunpack.c.l.b16 %v301
  %v541 = vunpack.c.l.b16 %v302
  %v542 = vunpack.c.l.b16 %v303
  %v543 = vunpack.c.l.b16 %v304
  %v544 = vunpack.c.l.b16 %v305
  %v545 = vunpack.c.l.b16 %v306
  %v546 = vunpack.c.l.b16 %v307
  %v547 = vunpack.c.l.b16 %v308
  %v548 = vunpack.c.l.b16 %v309
  %v549 = vunpack.c.l.b16 %v310
  %v550 = vunpack.c.l.b16 %v311
  %v551 = vunpack.c.l.b16 %v312
  %v552 = vunpack.c.l.b16 %v313
  %v553 = vunpack.c.l.b16 %v314
  %v554 = vunpack.c.l.b16 %v315
  %v555 = vunpack.c.l.b16 %v316
  %v556 = vunpack.c.l.b16 %v317
  %v557 = vunpack.c.l.b16 %v318
  %v558 = vunpack.c.l.b16 %v319
  %v559 = vunpack.c.l.b16 %v320
  %v560 = vunpack.c.l.b16 %v321
  %v561 = vunpack.c.l.b16 %v322
  %v562 = vunpack.c.l.b16 %v323
  %v563 = vunpack.c.l.b16 %v324
  %v564 = vunpack.c.l.b16 %v325
  %v565 = vunpack.c.l.b16 %v326
  %v566 = vunpack.c.l.b16 %v327
  %v567 = vunpack.c.l.b16 %v328
  %v568 = vunpack.c.l.b16 %v329
  %v569 = vunpack.c.l.b16 %v330
  %v570 = vunpack.c.l.b16 %v331
  %v571 = vunpack.c.l.b16 %v332
  %v572 = vunpack.c.l.b16 %v333
  %v573 = vunpack.c.l.b16 %v334
  %v574 = vunpack.c.l.b16 %v335
  %v575 = vunpack.c.l.b16 %v336
  %v576 = vunpack.c.l.b16 %v337
  %v577 = vunpack.c.l.b16 %v338
  %v578 = vunpack.c.l.b16 %v339
  %v579 = vunpack.c.l.b16 %v340
  %v580 = vunpack.c.l.b16 %v341
  %v581 = vunpack.c.l.b16 %v342
  %v582 = vunpack.c.l.b16 %v343
  %v583 = vunpack.c.l.b16 %v344
  %v584 = vunpack.c.l.b16 %v345
  %v585 = vunpack.c.l.b16 %v346
  %v586 = vunpack.c.l.b16 %v347
  %v587 = vunpack.c.l.b16 %v348
  %v588 = vunpack.c.l.b16 %v349
  %v589 = vunpack.c.l.b16 %v350
  %v590 = vunpack.c.l.b16 %v351
  %v591 = vunpack.c.l.b16 %v352
  %v592 = vunpack.c.l.b16 %v353
  %v593 = vunpack.c.l.b16 %v354
  %v594 = vunpack.c.l.b16 %v355
  %v595 = vunpack.c.l.b16 %v356
  %v596 = vunpack.c.l.b16 %v357
  %v597 = vunpack.c.l.b16 %v358
  %v598 = vunpack.c.l.b16 %v359
  %v599 = vunpack.c.l.b16 %v360
  %v600 = vunpack.c.l.b16 %v361
  %v601 = vunpack.c.l.b16 %v362
  %v602 = vunpack.c.l.b16 %v363
  %v603 = vunpack.c.l.b16 %v364
  %v604 = vpack.c.b16 %v541, %v540
  %v605 = vpack.c.b16 %v543, %v542
  %v606 = vpack.c.b16 %v545, %v544
  %v607 = vpack.c.b16 %v547, %v546
  %v608 = vpack.c.b16 %v549, %v548
  %v609 = vpack.c.b16 %v551, %v550
  %v610 = vpack.c.b16 %v553, %v552
  %v611 = vpack.c.b16 %v555, %v554
  %v612 = vpack.c.b16 %v557, %v556
  %v613 = vpack.c.b16 %v559, %v558
  %v614 = vpack.c.b16 %v561, %v560
  %v615 = vpack.c.b16 %v563, %v562
  %v616 = vpack.c.b16 %v565, %v564
  %v617 = vpack.c.b16 %v567, %v566
  %v618 = vpack.c.b16 %v569, %v568
  %v619 = vpack.c.b16 %v571, %v570
  %v620 = vpack.c.b16 %v573, %v572
  %v621 = vpack.c.b16 %v575, %v574
  %v622 = vpack.c.b16 %v577, %v576
  %v623 = vpack.c.b16 %v579, %v578
  %v624 = vpack.c.b16 %v581, %v580
  %v625 = vpack.c.b16 %v583, %v582
  %v626 = vpack.c.b16 %v585, %v584
  %v627 = vpack.c.b16 %v587, %v586
  %v628 = vpack.c.b16 %v589, %v588
  %v629 = vpack.c.b16 %v591, %v590
  %v630 = vpack.c.b16 %v593, %v592
  %v631 = vpack.c.b16 %v595, %v594
  %v632 = vpack.c.b16 %v597, %v596
  %v633 = vpack.c.b16 %v599, %v598
  %v634 = vpack.c.b16 %v601, %v600
  %v635 = vpack.c.b16 %v603, %v602
  %668 = vmatpush.bf16.msra.mxu0 %v611
  %669 = vmatpush.bf16.msra.mxu0 %v610
  %670 = vmatpush.bf16.msra.mxu0 %v609
  %671 = vmatpush.bf16.msra.mxu0 %v608
  %672 = vmatpush.bf16.msra.mxu0 %v607
  %673 = vmatpush.bf16.msra.mxu0 %v606
  %674 = vmatpush.bf16.msra.mxu0 %v605
  %675 = vmatpush.bf16.msra.mxu0 %v604
  %676 = vmatmul.bf16.gmra.mxu0 %v468
  %v677 = vpop.f32.mrf.mxu0
  %v678 = vadd.f32 %v367, %v677
  %v679 = vpop.f32.mrf.mxu0
  %680 = vdwg.mxu0
  %681 = vmatpush.bf16.msra.mxu0 %v619
  %682 = vmatpush.bf16.msra.mxu0 %v618
  %683 = vmatpush.bf16.msra.mxu0 %v617
  %684 = vmatpush.bf16.msra.mxu0 %v616
  %685 = vmatpush.bf16.msra.mxu0 %v615
  %686 = vmatpush.bf16.msra.mxu0 %v614
  %687 = vmatpush.bf16.msra.mxu0 %v613
  %688 = vmatpush.bf16.msra.mxu0 %v612
  %689 = vmatmul.bf16.gmra.mxu0 %v469
  %v690 = vpop.f32.mrf.mxu0
  %v691 = vadd.f32 %v678, %v690
  %v692 = vpop.f32.mrf.mxu0
  %693 = vdwg.mxu0
  %694 = vmatpush.bf16.msra.mxu0 %v627
  %695 = vmatpush.bf16.msra.mxu0 %v626
  %696 = vmatpush.bf16.msra.mxu0 %v625
  %697 = vmatpush.bf16.msra.mxu0 %v624
  %698 = vmatpush.bf16.msra.mxu0 %v623
  %699 = vmatpush.bf16.msra.mxu0 %v622
  %700 = vmatpush.bf16.msra.mxu0 %v621
  %701 = vmatpush.bf16.msra.mxu0 %v620
  %702 = vmatmul.bf16.gmra.mxu0 %v470
  %v703 = vpop.f32.mrf.mxu0
  %v704 = vadd.f32 %v691, %v703
  %v705 = vpop.f32.mrf.mxu0
  %706 = vdwg.mxu0
  %707 = vmatpush.bf16.msra.mxu0 %v635
  %708 = vmatpush.bf16.msra.mxu0 %v634
  %709 = vmatpush.bf16.msra.mxu0 %v633
  %710 = vmatpush.bf16.msra.mxu0 %v632
  %711 = vmatpush.bf16.msra.mxu0 %v631
  %712 = vmatpush.bf16.msra.mxu0 %v630
  %713 = vmatpush.bf16.msra.mxu0 %v629
  %714 = vmatpush.bf16.msra.mxu0 %v628
  %715 = vmatmul.bf16.gmra.mxu0 %v471
  %v716 = vpop.f32.mrf.mxu0
  %v717 = vadd.f32 %v704, %v716
  %v718 = vpop.f32.mrf.mxu0
  %719 = vdwg.mxu0
  %v720 = vmax.f32 %v717, 0.0
  %v721 = vpack.c.bf16 %v720, %v720
  %v722 = vld [vmem:[%s3] sm:$0xf]
  %v723 = vld [vmem:[%s3 + $0x4] sm:$0xf]
  %v724 = vld [vmem:[%s3 + $0x8] sm:$0xf]
  %v725 = vld [vmem:[%s3 + $0xc] sm:$0xf]
  %v726 = vld [vmem:[%s3 + $0x10] sm:$0xf]
  %v727 = vld [vmem:[%s3 + $0x14] sm:$0xf]
  %v728 = vld [vmem:[%s3 + $0x18] sm:$0xf]
  %v729 = vld [vmem:[%s3 + $0x1c] sm:$0xf]
  %v730 = vld [vmem:[%s4] sm:$0x1]
  %v732 = vperm.slane %v730, 0
  %v742 = vunpack.c.l.b16 %v722
  %v743 = vunpack.c.l.b16 %v723
  %v744 = vunpack.c.l.b16 %v724
  %v745 = vunpack.c.l.b16 %v725
  %v746 = vunpack.c.l.b16 %v726
  %v747 = vunpack.c.l.b16 %v727
  %v748 = vunpack.c.l.b16 %v728
  %v749 = vunpack.c.l.b16 %v729
  %v750 = vpack.c.b16 %v743, %v742
  %v751 = vpack.c.b16 %v745, %v744
  %v752 = vpack.c.b16 %v747, %v746
  %v753 = vpack.c.b16 %v749, %v748
  %vm758 = vcmask 523264
  %v760 = vsel %vm758, %v721, 0
  %762 = vmatpush.bf16.msra.mxu0 0
  %763 = vmatpush.bf16.msra.mxu0 0
  %764 = vmatpush.bf16.msra.mxu0 0
  %765 = vmatpush.bf16.msra.mxu0 0
  %766 = vmatpush.bf16.msra.mxu0 %v753
  %767 = vmatpush.bf16.msra.mxu0 %v752
  %768 = vmatpush.bf16.msra.mxu0 %v751
  %769 = vmatpush.bf16.msra.mxu0 %v750
  %770 = vmatmul.bf16.gmra.mxu0 %v760
  %v771 = vpop.f32.mrf.mxu0
  %v772 = vadd.f32 %v732, %v771
  %v773 = vpop.f32.mrf.mxu0
  %774 = vdwg.mxu0
  %v775 = vmax.f32 %v772, 0.0
  %v776 = vld [vmem:[%s5] sm:$0x1]
  %v778 = vperm.slane %v776, 0
  %v780 = vmul.f32 %v775, %v778
  %v781 = vsel %vm758, %v780, 0.0
  %782 = vadd.xlane.f32.xlu0 %v781
  %v783 = vpop.xlane.xlu0 %782
  %v784 = vld [vmem:[#allocation2] sm:$0x1]
  %v786 = vperm.slane %v784, 0
  %v788 = vadd.f32 %v783, %v786
  %v789 = vxor.u32 %v788, 2147483648
  %v790 = vmul.f32 %v789, 1.442695
  %v791 = vpow.pop %v790
  %v792 = vadd.f32 %v791, 1.0
  %v793 = vrcp.pop %v792
  %v794 = vmul.f32 %v792, %v793
  %v795 = vsub.f32 1.0, %v794
  %v796 = vmul.f32 %v793, %v795
  %v797 = vadd.f32 %v793, %v796
  %vm798 = vweird.f32 %v792
  %vm799 = vweird.f32 %v793
  %vm800 = vmor %vm798, %vm799
  %v801 = vsel %vm800, %v793, %v797
  %v802 = vand.u32 2147483647, %v792
  %vm803 = vcmp.eq.f32.partialorder %v802, 8.507059e+37
  %v804 = vand.u32 %v792, 2147483648
  %v805 = vor.u32 1.1754944e-38, %v804
  %v806 = vsel %vm803, %v805, %v801
  %v807 = vmul.f32 1.0, %v806
  %vm808 = vcmask 7168
  %809 = vst.msk [vmem:[%s7] sm:$0xff] %vm808, %v807
  // Predicated region
  $region30: #{tpu_custom_call.1} parent=0 // pred_check
    _
  $region31: #{tpu_custom_call.1} parent=0 // pred_check_branch
    %811 = sbr.rel (0) target = $region33
  $region32: #{tpu_custom_call.1} parent=0 // pred_region
    _
  $region33: #{tpu_custom_call.1} parent=0 // pred_fallthru
    _
  // Predicated region
  $region34: #{tpu_custom_call.1} parent=0 // pred_check
    _
  $region35: #{tpu_custom_call.1} parent=0 // pred_check_branch
    %813 = sbr.rel (0) target = $region37
  $region36: #{tpu_custom_call.1} parent=0 // pred_region
    _
  $region37: #{tpu_custom_call.1} parent=0 // pred_fallthru
    _

</llo_original>
